<compile_context>
chip_gen: v6e
topology: v6e:2x2x1
jax: 0.10.0
libtpu: 0.0.40
codegen_flags: <defaults>
</compile_context>

<pallas_src>
import functools

import numpy as np

import jax
import jax.numpy as jnp
from jax.experimental import pallas as pl
from jax.experimental.pallas import tpu as pltpu


_LN_EPS = 1e-5


# ---------------------------------------------------------------------------
# Plain-JAX glue + host-side helpers
# ---------------------------------------------------------------------------
def _gelu_exact(x):
    # nn.GELU default (erf form).
    return 0.5 * x * (1.0 + jax.lax.erf(x * 0.7071067811865476))


def window_partition(x, window_size):
    B, H, W, C = x.shape
    x = x.reshape(B, H // window_size, window_size, W // window_size, window_size, C)
    x = jnp.transpose(x, (0, 1, 3, 2, 4, 5))
    return x.reshape(-1, window_size, window_size, C)


def window_reverse(windows, window_size, H, W):
    B = windows.shape[0] // ((H // window_size) * (W // window_size))
    x = windows.reshape(B, H // window_size, W // window_size, window_size, window_size, -1)
    x = jnp.transpose(x, (0, 1, 3, 2, 4, 5))
    return x.reshape(B, H, W, -1)


def _spatial_attention(x, conv_w):
    # Faithful to the reference code: the (B, H, W, C) tensor is fed to a module
    # written for NCHW, so the mean/max reductions and the 7x7 conv run with H
    # playing the role of "channels".
    avg_out = jnp.mean(x, axis=1, keepdims=True)
    max_out = jnp.max(x, axis=1, keepdims=True)
    y = jnp.concatenate([avg_out, max_out], axis=1)            # (B, 2, W, C)
    y = jax.lax.conv_general_dilated(
        y, conv_w, window_strides=(1, 1), padding=((3, 3), (3, 3)),
        dimension_numbers=("NCHW", "OIHW", "NCHW"))
    return jax.nn.sigmoid(y) * x


def _relative_position_index(window_size):
    ws = window_size
    coords = np.stack(np.meshgrid(np.arange(ws), np.arange(ws), indexing="ij"))
    flat = coords.reshape(2, -1)
    rel = flat[:, :, None] - flat[:, None, :]
    rel = rel.transpose(1, 2, 0).astype(np.int64)
    rel[:, :, 0] += ws - 1
    rel[:, :, 1] += ws - 1
    rel[:, :, 0] *= 2 * ws - 1
    return rel.sum(-1)                                          # (N, N)


def _relative_position_bias(table, window_size, num_heads):
    N = window_size * window_size
    idx = _relative_position_index(window_size).reshape(-1)
    bias = table[idx].reshape(N, N, num_heads)
    return jnp.transpose(bias, (2, 0, 1)).astype(jnp.float32)   # (nh, N, N)


def _shift_attn_mask(H, W, window_size, shift_size):
    ws, ss = window_size, shift_size
    img = np.zeros((1, H, W, 1), np.float32)
    cnt = 0
    for hs in (slice(0, -ws), slice(-ws, -ss), slice(-ss, None)):
        for wsl in (slice(0, -ws), slice(-ws, -ss), slice(-ss, None)):
            img[:, hs, wsl, :] = cnt
            cnt += 1
    m = img.reshape(1, H // ws, ws, W // ws, ws, 1)
    m = m.transpose(0, 1, 3, 2, 4, 5).reshape(-1, ws * ws)
    attn_mask = m[:, None, :] - m[:, :, None]
    attn_mask = np.where(attn_mask != 0, -100.0, 0.0).astype(np.float32)
    return jnp.asarray(attn_mask)                               # (nW, N, N)


def _effective_window(input_resolution, window_size, shift_size):
    if min(input_resolution) <= window_size:
        return min(input_resolution), 0
    return window_size, shift_size


def _pick_row_tile(n_rows, cap=1024):
    # Largest multiple-of-8 divisor of n_rows; capped so tiles stay comfortably
    # inside VMEM (v7x: 64 MiB physical) and the grid keeps >= 2 steps when
    # possible so both v7x TensorCores get work.
    target = min(cap, n_rows if n_rows < 16 else max(8, n_rows // 2))
    for t in range(target, 7, -1):
        if n_rows % t == 0 and t % 8 == 0:
            return t
    return n_rows


def _pick_window_tile(n_windows, tokens_per_window, cap_rows=2048):
    max_wb = max(1, min(n_windows, cap_rows // max(1, tokens_per_window)))
    if n_windows >= 2:
        max_wb = min(max_wb, max(1, n_windows // 2))
    for wb in range(max_wb, 0, -1):
        if n_windows % wb == 0:
            return wb
    return 1


# ---------------------------------------------------------------------------
# Pallas kernels
# ---------------------------------------------------------------------------
def _layernorm_kernel(x_ref, g_ref, b_ref, o_ref):
    """LayerNorm over the last (C) axis, single-pass stats (var = E[x^2]-mean^2)."""
    x = x_ref[...].astype(jnp.float32)
    mean = jnp.mean(x, axis=-1, keepdims=True)
    ex2 = jnp.mean(x * x, axis=-1, keepdims=True)
    inv = jax.lax.rsqrt(ex2 - mean * mean + _LN_EPS)
    xn = (x - mean) * inv
    o_ref[...] = (xn * g_ref[...] + b_ref[...]).astype(o_ref.dtype)


def _window_attn_kernel(*refs, num_heads, has_mask, cdt):
    """Fused window multi-head self-attention over a tile of whole windows.

    refs (has_mask=True):  x, w_qkv, b_qkv, rel_bias, mask, w_proj, b_proj, out
    refs (has_mask=False): x, w_qkv, b_qkv, rel_bias,       w_proj, b_proj, out
    x: (WB, N, C); w_qkv: (C, 3C) with the qk scale pre-folded into the Q block;
    rel_bias: (nh, N, N); mask: (WB, N, N); w_proj: (C, C).
    """
    if has_mask:
        (x_ref, wqkv_ref, bqkv_ref, bias_ref, mask_ref,
         wproj_ref, bproj_ref, o_ref) = refs
    else:
        (x_ref, wqkv_ref, bqkv_ref, bias_ref,
         wproj_ref, bproj_ref, o_ref) = refs
        mask_ref = None

    WB, N, C = x_ref.shape
    hd = C // num_heads

    x2 = x_ref[...].reshape(WB * N, C).astype(cdt)
    # QKV projection: MXU in `cdt`, f32 accumulation, bias added in f32.
    qkv = jnp.dot(x2, wqkv_ref[...], preferred_element_type=jnp.float32)
    qkv = (qkv + bqkv_ref[...]).astype(cdt)

    w_proj = wproj_ref[...]                       # (C, C), already in cdt
    acc = jnp.zeros((WB * N, C), jnp.float32)

    for h in range(num_heads):
        q = qkv[:, h * hd:(h + 1) * hd].reshape(WB, N, hd)
        k = qkv[:, C + h * hd:C + (h + 1) * hd].reshape(WB, N, hd)
        v = qkv[:, 2 * C + h * hd:2 * C + (h + 1) * hd].reshape(WB, N, hd)

        logits = jnp.einsum("bnd,bmd->bnm", q, k,
                            preferred_element_type=jnp.float32)
        logits = logits + bias_ref[h][None, :, :]
        if mask_ref is not None:
            logits = logits + mask_ref[...]

        m = jnp.max(logits, axis=-1, keepdims=True)
        p = jnp.exp(logits - m)
        p = p / jnp.sum(p, axis=-1, keepdims=True)

        o_h = jnp.einsum("bnm,bmd->bnd", p.astype(cdt), v,
                         preferred_element_type=jnp.float32)
        # Accumulate the output projection per head (avoids a lane-dim concat).
        acc = acc + jnp.dot(o_h.reshape(WB * N, hd).astype(cdt),
                            w_proj[h * hd:(h + 1) * hd, :],
                            preferred_element_type=jnp.float32)

    out = acc + bproj_ref[...]
    o_ref[...] = out.reshape(WB, N, C).astype(o_ref.dtype)


def _mlp_residual_kernel(attn_ref, short_ref, w1_ref, b1_ref, w2_ref, b2_ref,
                         o_ref, *, cdt):
    """out = h + fc2(gelu(fc1(norm2(h)))), with h = shortcut + attn.

    norm2's gamma/beta are folded into (w1, b1) by the wrapper; the kernel only
    normalizes (single-pass stats) and runs the two matmuls (f32 accumulation).
    """
    h = short_ref[...].astype(jnp.float32) + attn_ref[...].astype(jnp.float32)
    mean = jnp.mean(h, axis=-1, keepdims=True)
    ex2 = jnp.mean(h * h, axis=-1, keepdims=True)
    inv = jax.lax.rsqrt(ex2 - mean * mean + _LN_EPS)
    xn = ((h - mean) * inv).astype(cdt)

    hid = jnp.dot(xn, w1_ref[...], preferred_element_type=jnp.float32)
    hid = _gelu_exact(hid + b1_ref[...])
    mlp = jnp.dot(hid.astype(cdt), w2_ref[...],
                  preferred_element_type=jnp.float32) + b2_ref[...]
    o_ref[...] = (h + mlp).astype(o_ref.dtype)


# ---------------------------------------------------------------------------
# Forward wrapper
# ---------------------------------------------------------------------------
def swin_block_forward(x, params, *, input_resolution, num_heads,
                       window_size=7, shift_size=0, mlp_ratio=4.0,
                       compute_dtype=jnp.bfloat16):
    """SwinTransformerBlock.forward (dropout / drop_path are identity at p=0)."""
    H, W = input_resolution
    B, L, C = x.shape
    assert L == H * W, "input feature has wrong size"
    ws, ss = _effective_window(input_resolution, window_size, shift_size)
    assert H % ws == 0 and W % ws == 0, "resolution must be divisible by window"
    N = ws * ws
    nh = num_heads
    hd = C // nh
    scale = hd ** -0.5
    hidden = int(C * mlp_ratio)
    cdt = compute_dtype
    out_dtype = x.dtype
    f32 = jnp.float32

    n_tok = B * L
    x_tok = x.reshape(n_tok, C)

    # ---------------- norm1 (Pallas) ----------------
    tile_ln = _pick_row_tile(n_tok)
    g1 = params["gamma1"].astype(f32).reshape(1, C)
    b1 = params["beta1"].astype(f32).reshape(1, C)
    x_norm = pl.pallas_call(
        _layernorm_kernel,
        out_shape=jax.ShapeDtypeStruct((n_tok, C), out_dtype),
        grid_spec=pltpu.PrefetchScalarGridSpec(
            num_scalar_prefetch=0,
            grid=(n_tok // tile_ln,),
            in_specs=[
                pl.BlockSpec((tile_ln, C), lambda i: (i, 0)),
                pl.BlockSpec((1, C), lambda i: (0, 0)),
                pl.BlockSpec((1, C), lambda i: (0, 0)),
            ],
            out_specs=pl.BlockSpec((tile_ln, C), lambda i: (i, 0)),
        ),
        compiler_params=pltpu.CompilerParams(dimension_semantics=("parallel",)),
    )(x_tok, g1, b1)

    # ------ SpatialAttention + cyclic shift + window partition (JAX glue) -----
    # TODO(synk): SpatialAttention's tiny 2->1-channel 7x7 conv stays in XLA;
    # it has no clean Pallas win.
    xs = _spatial_attention(x_norm.reshape(B, H, W, C), params["sa_w"])
    if ss > 0:
        xs = jnp.roll(xs, shift=(-ss, -ss), axis=(1, 2))
    x_windows = window_partition(xs, ws).reshape(-1, N, C)      # (B_, N, C)
    n_win = x_windows.shape[0]

    # ---------------- window attention (Pallas) ----------------
    # Fold the qk scale into the Q columns of w_qkv / b_qkv; pre-cast all
    # weights to the MXU compute dtype (no per-step casts inside the kernel).
    w_qkv = params["w_qkv"].astype(f32).at[:, :C].multiply(scale)
    b_qkv = params["b_qkv"].astype(f32).at[:C].multiply(scale)
    w_qkv_c = w_qkv.astype(cdt)
    b_qkv_2d = b_qkv.reshape(1, 3 * C)
    w_proj_c = params["w_proj"].astype(cdt)
    b_proj_2d = params["b_proj"].astype(f32).reshape(1, C)
    rel_bias = _relative_position_bias(params["rel_bias_table"], ws, nh)

    wb = _pick_window_tile(n_win, N)
    has_mask = ss > 0

    inputs = [x_windows, w_qkv_c, b_qkv_2d, rel_bias]
    in_specs = [
        pl.BlockSpec((wb, N, C), lambda i: (i, 0, 0)),
        pl.BlockSpec((C, 3 * C), lambda i: (0, 0)),
        pl.BlockSpec((1, 3 * C), lambda i: (0, 0)),
        pl.BlockSpec((nh, N, N), lambda i: (0, 0, 0)),
    ]
    if has_mask:
        mask = _shift_attn_mask(H, W, ws, ss)                   # (nW, N, N)
        inputs.append(jnp.tile(mask, (B, 1, 1)))                # (B_, N, N)
        in_specs.append(pl.BlockSpec((wb, N, N), lambda i: (i, 0, 0)))
    inputs += [w_proj_c, b_proj_2d]
    in_specs += [
        pl.BlockSpec((C, C), lambda i: (0, 0)),
        pl.BlockSpec((1, C), lambda i: (0, 0)),
    ]

    attn_windows = pl.pallas_call(
        functools.partial(_window_attn_kernel, num_heads=nh,
                          has_mask=has_mask, cdt=cdt),
        out_shape=jax.ShapeDtypeStruct((n_win, N, C), out_dtype),
        grid_spec=pltpu.PrefetchScalarGridSpec(
            num_scalar_prefetch=0,
            grid=(n_win // wb,),
            in_specs=in_specs,
            out_specs=pl.BlockSpec((wb, N, C), lambda i: (i, 0, 0)),
        ),
        compiler_params=pltpu.CompilerParams(dimension_semantics=("parallel",)),
    )(*inputs)

    # ------------- window reverse + un-shift (JAX glue) -------------
    shifted = window_reverse(attn_windows.reshape(-1, ws, ws, C), ws, H, W)
    if ss > 0:
        shifted = jnp.roll(shifted, shift=(ss, ss), axis=(1, 2))
    attn_flat = shifted.reshape(n_tok, C)

    # ------- residual + norm2 + MLP + residual (Pallas, fused) -------
    gamma2 = params["gamma2"].astype(f32)
    beta2 = params["beta2"].astype(f32)
    w1 = params["w1"].astype(f32)
    w1_fold = (gamma2[:, None] * w1).astype(cdt)                # norm2.gamma -> fc1
    b1_fold = (beta2 @ w1 + params["b1"].astype(f32)).reshape(1, hidden)
    w2_c = params["w2"].astype(cdt)
    b2_2d = params["b2"].astype(f32).reshape(1, C)

    tile_m = _pick_row_tile(n_tok)
    out = pl.pallas_call(
        functools.partial(_mlp_residual_kernel, cdt=cdt),
        out_shape=jax.ShapeDtypeStruct((n_tok, C), out_dtype),
        grid_spec=pltpu.PrefetchScalarGridSpec(
            num_scalar_prefetch=0,
            grid=(n_tok // tile_m,),
            in_specs=[
                pl.BlockSpec((tile_m, C), lambda i: (i, 0)),
                pl.BlockSpec((tile_m, C), lambda i: (i, 0)),
                pl.BlockSpec((C, hidden), lambda i: (0, 0)),
                pl.BlockSpec((1, hidden), lambda i: (0, 0)),
                pl.BlockSpec((hidden, C), lambda i: (0, 0)),
                pl.BlockSpec((1, C), lambda i: (0, 0)),
            ],
            out_specs=pl.BlockSpec((tile_m, C), lambda i: (i, 0)),
        ),
        compiler_params=pltpu.CompilerParams(dimension_semantics=("parallel",)),
    )(attn_flat, x_tok, w1_fold, b1_fold, w2_c, b2_2d)

    return out.reshape(B, L, C)


# ---------------------------------------------------------------------------
# Pure-JAX reference (mirrors the PyTorch forward)
# ---------------------------------------------------------------------------
def _layernorm_ref(x, gamma, beta):
    mean = jnp.mean(x, axis=-1, keepdims=True)
    var = jnp.mean((x - mean) ** 2, axis=-1, keepdims=True)
    return (x - mean) * jax.lax.rsqrt(var + _LN_EPS) * gamma + beta


def _reference(x, params, *, input_resolution, num_heads, window_size,
               shift_size, mlp_ratio):
    HP = jax.lax.Precision.HIGHEST
    H, W = input_resolution
    B, L, C = x.shape
    ws, ss = _effective_window(input_resolution, window_size, shift_size)
    N = ws * ws
    nh = num_heads
    hd = C // nh
    scale = hd ** -0.5

    shortcut = x
    xn = _layernorm_ref(x, params["gamma1"], params["beta1"])
    xs = _spatial_attention(xn.reshape(B, H, W, C), params["sa_w"])
    if ss > 0:
        xs = jnp.roll(xs, shift=(-ss, -ss), axis=(1, 2))
    xw = window_partition(xs, ws).reshape(-1, N, C)
    B_ = xw.shape[0]

    qkv = jnp.einsum("bnc,cd->bnd", xw, params["w_qkv"], precision=HP) + params["b_qkv"]
    qkv = qkv.reshape(B_, N, 3, nh, hd).transpose(2, 0, 3, 1, 4)
    q, k, v = qkv[0] * scale, qkv[1], qkv[2]
    attn = jnp.einsum("bhnd,bhmd->bhnm", q, k, precision=HP)
    attn = attn + _relative_position_bias(params["rel_bias_table"], ws, nh)[None]
    if ss > 0:
        mask = _shift_attn_mask(H, W, ws, ss)
        nW = mask.shape[0]
        attn = attn.reshape(B_ // nW, nW, nh, N, N) + mask[None, :, None]
        attn = attn.reshape(B_, nh, N, N)
    attn = jax.nn.softmax(attn, axis=-1)
    out = jnp.einsum("bhnm,bhmd->bhnd", attn, v, precision=HP)
    out = out.transpose(0, 2, 1, 3).reshape(B_, N, C)
    out = jnp.einsum("bnc,cd->bnd", out, params["w_proj"], precision=HP) + params["b_proj"]

    shifted = window_reverse(out.reshape(-1, ws, ws, C), ws, H, W)
    if ss > 0:
        shifted = jnp.roll(shifted, shift=(ss, ss), axis=(1, 2))
    xres = shortcut + shifted.reshape(B, L, C)

    h = _layernorm_ref(xres, params["gamma2"], params["beta2"])
    hid = _gelu_exact(jnp.einsum("blc,ch->blh", h, params["w1"], precision=HP) + params["b1"])
    mlp = jnp.einsum("blh,hc->blc", hid, params["w2"], precision=HP) + params["b2"]
    return xres + mlp


# ---------------------------------------------------------------------------
# Deterministic parameter construction + demo
# ---------------------------------------------------------------------------
def init_params(key, dim, num_heads, window_size, mlp_ratio):
    C = dim
    hidden = int(dim * mlp_ratio)
    ws = window_size
    ks = jax.random.split(key, 14)

    def nrm(k, shape, std=0.02):
        return std * jax.random.normal(k, shape, jnp.float32)

    return {
        "gamma1": 1.0 + 0.1 * jax.random.normal(ks[0], (C,), jnp.float32),
        "beta1": 0.05 * jax.random.normal(ks[1], (C,), jnp.float32),
        "sa_w": 0.1 * jax.random.normal(ks[2], (1, 2, 7, 7), jnp.float32),
        "w_qkv": nrm(ks[3], (C, 3 * C)),          # (in, out) layout
        "b_qkv": nrm(ks[4], (3 * C,)),
        "rel_bias_table": nrm(ks[5], ((2 * ws - 1) * (2 * ws - 1), num_heads)),
        "w_proj": nrm(ks[6], (C, C)),
        "b_proj": nrm(ks[7], (C,)),
        "gamma2": 1.0 + 0.1 * jax.random.normal(ks[8], (C,), jnp.float32),
        "beta2": 0.05 * jax.random.normal(ks[9], (C,), jnp.float32),
        "w1": nrm(ks[10], (C, hidden)),
        "b1": nrm(ks[11], (hidden,)),
        "w2": nrm(ks[12], (hidden, C)),
        "b2": nrm(ks[13], (C,)),
    }


if __name__ == "__main__":
    B, H, W = 2, 16, 16
    dim, num_heads, window_size, mlp_ratio = 32, 4, 8, 4.0

    key = jax.random.PRNGKey(0)
    kx, kp = jax.random.split(key)
    x = jax.random.normal(kx, (B, H * W, dim), jnp.float32)

    ws_eff, _ = _effective_window((H, W), window_size, 0)
    params = init_params(kp, dim, num_heads, ws_eff, mlp_ratio)

    for shift in (0, window_size // 2):           # W-MSA and SW-MSA paths
        ref = _reference(x, params, input_resolution=(H, W), num_heads=num_heads,
                         window_size=window_size, shift_size=shift,
                         mlp_ratio=mlp_ratio)

        # f32 MXU operands: tight check against the high-precision reference.
        out_f32 = swin_block_forward(
            x, params, input_resolution=(H, W), num_heads=num_heads,
            window_size=window_size, shift_size=shift, mlp_ratio=mlp_ratio,
            compute_dtype=jnp.float32)
        out_f32 = jax.block_until_ready(out_f32)
        assert out_f32.shape == (B, H * W, dim), out_f32.shape
        err = float(jnp.max(jnp.abs(out_f32 - ref)))
        assert jnp.allclose(out_f32, ref, atol=5e-3, rtol=5e-3), (shift, err)

        # bf16 MXU operands (recommended perf config): looser sanity check.
        out_bf16 = swin_block_forward(
            x, params, input_resolution=(H, W), num_heads=num_heads,
            window_size=window_size, shift_size=shift, mlp_ratio=mlp_ratio,
            compute_dtype=jnp.bfloat16)
        out_bf16 = jax.block_until_ready(out_bf16)
        err_bf = float(jnp.max(jnp.abs(out_bf16 - ref)))
        assert jnp.allclose(out_bf16, ref, atol=5e-2, rtol=5e-2), (shift, err_bf)

    print("KERNEL_OK")
</pallas_src>

<mosaic_0001>
module attributes {stable_mosaic.version = 11 : i64} {
  func.func @_layernorm_kernel(%arg0: i32, %arg1: memref<256x32xf32, #tpu.memory_space<vmem>>, %arg2: memref<1x32xf32, #tpu.memory_space<vmem>>, %arg3: memref<1x32xf32, #tpu.memory_space<vmem>>, %arg4: memref<256x32xf32, #tpu.memory_space<vmem>>) attributes {dimension_semantics = [#tpu.dimension_semantics<parallel>], iteration_bounds = array<i64: 2>, scalar_prefetch = 0 : i64, scratch_operands = 0 : i64, tpu.core_type = #tpu.core_type<tc>, window_params = [{transform_indices = @transform_0, window_bounds = array<i64: 256, 32>}, {pipeline_mode = #tpu.pipeline_mode<synchronous>, transform_indices = @transform_1, window_bounds = array<i64: 1, 32>}, {pipeline_mode = #tpu.pipeline_mode<synchronous>, transform_indices = @transform_2, window_bounds = array<i64: 1, 32>}, {transform_indices = @transform_3, window_bounds = array<i64: 256, 32>}]} {
    %c0 = arith.constant 0 : index
    %c0_0 = arith.constant 0 : index
    %0 = vector.load %arg1[%c0, %c0_0] : memref<256x32xf32, #tpu.memory_space<vmem>>, vector<256x32xf32>
    %cst = arith.constant dense<0.000000e+00> : vector<256xf32>
    %1 = vector.multi_reduction <add>, %0, %cst [1] : vector<256x32xf32> to vector<256xf32>
    %2 = vector.shape_cast %1 : vector<256xf32> to vector<256x1xf32>
    %cst_1 = arith.constant 3.200000e+01 : f32
    %3 = vector.broadcast %cst_1 : f32 to vector<256x1xf32>
    %4 = arith.divf %2, %3 : vector<256x1xf32>
    %5 = arith.mulf %0, %0 : vector<256x32xf32>
    %cst_2 = arith.constant dense<0.000000e+00> : vector<256xf32>
    %6 = vector.multi_reduction <add>, %5, %cst_2 [1] : vector<256x32xf32> to vector<256xf32>
    %7 = vector.shape_cast %6 : vector<256xf32> to vector<256x1xf32>
    %cst_3 = arith.constant 3.200000e+01 : f32
    %8 = vector.broadcast %cst_3 : f32 to vector<256x1xf32>
    %9 = arith.divf %7, %8 : vector<256x1xf32>
    %10 = arith.mulf %4, %4 : vector<256x1xf32>
    %11 = arith.subf %9, %10 : vector<256x1xf32>
    %cst_4 = arith.constant 9.99999974E-6 : f32
    %12 = vector.broadcast %cst_4 : f32 to vector<256x1xf32>
    %13 = arith.addf %11, %12 : vector<256x1xf32>
    %14 = math.rsqrt %13 : vector<256x1xf32>
    %15 = vector.broadcast %4 : vector<256x1xf32> to vector<256x32xf32>
    %16 = arith.subf %0, %15 : vector<256x32xf32>
    %17 = vector.broadcast %14 : vector<256x1xf32> to vector<256x32xf32>
    %18 = arith.mulf %16, %17 : vector<256x32xf32>
    %c0_5 = arith.constant 0 : index
    %c0_6 = arith.constant 0 : index
    %19 = vector.load %arg2[%c0_5, %c0_6] : memref<1x32xf32, #tpu.memory_space<vmem>>, vector<1x32xf32>
    %20 = vector.broadcast %19 : vector<1x32xf32> to vector<256x32xf32>
    %21 = arith.mulf %18, %20 : vector<256x32xf32>
    %c0_7 = arith.constant 0 : index
    %c0_8 = arith.constant 0 : index
    %22 = vector.load %arg3[%c0_7, %c0_8] : memref<1x32xf32, #tpu.memory_space<vmem>>, vector<1x32xf32>
    %23 = vector.broadcast %22 : vector<1x32xf32> to vector<256x32xf32>
    %24 = arith.addf %21, %23 : vector<256x32xf32>
    %c0_9 = arith.constant 0 : index
    %c0_10 = arith.constant 0 : index
    %25 = vector.load %arg4[%c0_9, %c0_10] : memref<256x32xf32, #tpu.memory_space<vmem>>, vector<256x32xf32>
    tpu.vector_store %arg4[%c0_9, %c0_10], %24 {strides = array<i32>} : memref<256x32xf32, #tpu.memory_space<vmem>>, vector<256x32xf32>,
    return
  }
  func.func @transform_0(%arg0: i32) -> (i32, i32) {
    %c0_i32 = arith.constant 0 : i32
    %c0_i32_0 = arith.constant 0 : i32
    return %arg0, %c0_i32 : i32, i32
  }
  func.func @transform_1(%arg0: i32) -> (i32, i32) {
    %c0_i32 = arith.constant 0 : i32
    %c0_i32_0 = arith.constant 0 : i32
    %c0_i32_1 = arith.constant 0 : i32
    return %c0_i32, %c0_i32_0 : i32, i32
  }
  func.func @transform_2(%arg0: i32) -> (i32, i32) {
    %c0_i32 = arith.constant 0 : i32
    %c0_i32_0 = arith.constant 0 : i32
    %c0_i32_1 = arith.constant 0 : i32
    return %c0_i32, %c0_i32_0 : i32, i32
  }
  func.func @transform_3(%arg0: i32) -> (i32, i32) {
    %c0_i32 = arith.constant 0 : i32
    %c0_i32_0 = arith.constant 0 : i32
    return %arg0, %c0_i32 : i32, i32
  }
}

</mosaic_0001>

<llo_original>
// kernel: tpu_custom_call.1
$region0: #{tpu_custom_call.1}
  #allocation0 [shape = 'u32[]', space=smem, size = 0x4, offset = 0x4, fixed_abs, tag = 'smem constant byte address 0x4 - core index']
  #allocation1 [shape = 'u32[144,128]{1,0:T(1,128)}', space=vmem, size = 0x12000, scoped, tag = 'internal scratch']
  %s0 = inlined_call_operand.vmem [shape: f32[512,32], index: 0, kind: input, shape index: {}]
  %s1 = inlined_call_operand.vmem [shape: f32[1,32], index: 1, kind: input, shape index: {}]
  %s2 = inlined_call_operand.vmem [shape: f32[1,32], index: 2, kind: input, shape index: {}]
  %s3 = inlined_call_operand.vmem [shape: f32[512,32], index: 3, kind: output, shape index: {}]
  %s4 = sld [smem:[#allocation0]]
  $region45: #{tpu_custom_call.1} parent=0
    _
  %s6 = ssub.s32 1, %s4
  %s7 = scalar_select 0, %s6, %s4
  loop: start=0, step=1, limit=4
  $region2: #{tpu_custom_call.1} parent=0 // loop_pre_header
    _
  $region3: #{tpu_custom_call.1} parent=0 // loop_header
    %s9 = sphi 0, %s13
    %p10 = scmp.ge.s32.totalorder %s9, 4
    %s19 = sphi 0, %s21
    %s22 = sphi 0, %s19
    %s23 = sphi 0, %s22
    %s39 = sphi 0, %s23
    %s43 = sphi 0, %s43
    %s45 = sphi 0, %s43
    %s46 = sphi 0, %s45
    %s60 = sphi 0, %s46
    %s64 = sphi 0, %s64
    %s66 = sphi 0, %s64
    %s67 = sphi 0, %s66
    %s81 = sphi 0, %s67
    %s87 = sphi 0, %s89
    %s90 = sphi 0, %s87
    %s91 = sphi 0, %s90
    %s107 = sphi 0, %s91
  $region4: #{tpu_custom_call.1} parent=0 // loop_header_branch
    %12 = sbr.rel (%p10) target = $region8
  $region5: #{tpu_custom_call.1} parent=0 // loop_body
    %s14 = ssub.s32 %s9, 1
    %s15 = ssub.s32 %s9, 2
    %s16 = sadd.s32 %s9, 1
    %s17 = ssub.s32 %s9, %s16
    %p18 = scmp.eq.s32.totalorder %s17, 0
    %s20 = sadd.s32 %s19, 1
    %s21 = scalar_select %p18, %s19, %s20
    %p24 = pneg %p18
    %p25 = scmp.eq.s32.totalorder %s9, 1
    %p26 = por %p24, %p25
    %p27 = scmp.ne.s32.totalorder %s19, %s22
    %p28 = scmp.eq.s32.totalorder %s9, 0
    %p29 = por %p27, %p28
    %p30 = scmp.ne.s32.totalorder %s19, %s22
    %p31 = scmp.eq.s32.totalorder %s14, 1
    %p32 = por %p30, %p31
    %p33 = scmp.ne.s32.totalorder %s22, %s23
    %p34 = scmp.eq.s32.totalorder %s14, 0
    %p35 = por %p33, %p34
    %p36 = scmp.ne.s32.totalorder %s22, %s23
    %p37 = scmp.eq.s32.totalorder %s15, 1
    %p38 = por %p36, %p37
    %p40 = scmp.ne.s32.totalorder %s23, %s39
    %p41 = scmp.eq.s32.totalorder %s15, 0
    %p42 = por %p40, %p41
    %s44 = sadd.s32 %s43, 1
    %p47 = scmp.eq.s32.totalorder %s9, 1
    %p48 = scmp.ne.s32.totalorder %s43, %s45
    %p49 = scmp.eq.s32.totalorder %s9, 0
    %p50 = por %p48, %p49
    %p51 = scmp.ne.s32.totalorder %s43, %s45
    %p52 = scmp.eq.s32.totalorder %s14, 1
    %p53 = por %p51, %p52
    %p54 = scmp.ne.s32.totalorder %s45, %s46
    %p55 = scmp.eq.s32.totalorder %s14, 0
    %p56 = por %p54, %p55
    %p57 = scmp.ne.s32.totalorder %s45, %s46
    %p58 = scmp.eq.s32.totalorder %s15, 1
    %p59 = por %p57, %p58
    %p61 = scmp.ne.s32.totalorder %s46, %s60
    %p62 = scmp.eq.s32.totalorder %s15, 0
    %p63 = por %p61, %p62
    %s65 = sadd.s32 %s64, 1
    %p68 = scmp.eq.s32.totalorder %s9, 1
    %p69 = scmp.ne.s32.totalorder %s64, %s66
    %p70 = scmp.eq.s32.totalorder %s9, 0
    %p71 = por %p69, %p70
    %p72 = scmp.ne.s32.totalorder %s64, %s66
    %p73 = scmp.eq.s32.totalorder %s14, 1
    %p74 = por %p72, %p73
    %p75 = scmp.ne.s32.totalorder %s66, %s67
    %p76 = scmp.eq.s32.totalorder %s14, 0
    %p77 = por %p75, %p76
    %p78 = scmp.ne.s32.totalorder %s66, %s67
    %p79 = scmp.eq.s32.totalorder %s15, 1
    %p80 = por %p78, %p79
    %p82 = scmp.ne.s32.totalorder %s67, %s81
    %p83 = scmp.eq.s32.totalorder %s15, 0
    %p84 = por %p82, %p83
    %s85 = ssub.s32 %s9, %s16
    %p86 = scmp.eq.s32.totalorder %s85, 0
    %s88 = sadd.s32 %s87, 1
    %s89 = scalar_select %p86, %s87, %s88
    %p92 = pneg %p86
    %p93 = scmp.eq.s32.totalorder %s9, 1
    %p94 = por %p92, %p93
    %p95 = scmp.ne.s32.totalorder %s87, %s90
    %p96 = scmp.eq.s32.totalorder %s9, 0
    %p97 = por %p95, %p96
    %p98 = scmp.ne.s32.totalorder %s87, %s90
    %p99 = scmp.eq.s32.totalorder %s14, 1
    %p100 = por %p98, %p99
    %p101 = scmp.ne.s32.totalorder %s90, %s91
    %p102 = scmp.eq.s32.totalorder %s14, 0
    %p103 = por %p101, %p102
    %p104 = scmp.ne.s32.totalorder %s90, %s91
    %p105 = scmp.eq.s32.totalorder %s15, 1
    %p106 = por %p104, %p105
    %p108 = scmp.ne.s32.totalorder %s91, %s107
    %p109 = scmp.eq.s32.totalorder %s15, 0
    %p110 = por %p108, %p109
    %p111 = scmp.le.s32.totalorder 1, %s9
    %p112 = scmp.lt.s32.totalorder %s9, 3
    %p113 = pnand %p111, %p112
    %p114 = pneg %p113
    // Predicated region
    $region9: #{tpu_custom_call.1} parent=5 // pred_check
      _
    $region10: #{tpu_custom_call.1} parent=5 // pred_check_branch
      %116 = sbr.rel (%p113) target = $region12
    $region11: #{tpu_custom_call.1} parent=5 // pred_region
      %s117 = ssub.s32 %s9, 1
      // Predicated region
      $region13: #{tpu_custom_call.1} parent=11 // pred_check
        %p118 = pneg %p56
      $region14: #{tpu_custom_call.1} parent=11 // pred_check_branch
        %120 = sbr.rel (%p118) target = $region16
      $region15: #{tpu_custom_call.1} parent=11 // pred_region
        _
      $region16: #{tpu_custom_call.1} parent=11 // pred_fallthru
        _
      // Predicated region
      $region17: #{tpu_custom_call.1} parent=11 // pred_check
        %p121 = pneg %p77
      $region18: #{tpu_custom_call.1} parent=11 // pred_check_branch
        %123 = sbr.rel (%p121) target = $region20
      $region19: #{tpu_custom_call.1} parent=11 // pred_region
        _
      $region20: #{tpu_custom_call.1} parent=11 // pred_fallthru
        _
    $region12: #{tpu_custom_call.1} parent=5 // pred_fallthru
      _
    %p124 = scmp.lt.s32.totalorder %s9, 2
    // Predicated region
    $region21: #{tpu_custom_call.1} parent=5 // pred_check
      %p125 = pneg %p124
    $region22: #{tpu_custom_call.1} parent=5 // pred_check_branch
      %127 = sbr.rel (%p125) target = $region24
    $region23: #{tpu_custom_call.1} parent=5 // pred_region
      // Predicated region
      $region25: #{tpu_custom_call.1} parent=23 // pred_check
        %p128 = pneg %p29
      $region26: #{tpu_custom_call.1} parent=23 // pred_check_branch
        %130 = sbr.rel (%p128) target = $region28
      $region27: #{tpu_custom_call.1} parent=23 // pred_region
        %s131 = smul.u32 32, %s9
        %p132 = scmp.lt.s32.totalorder %s131, 63
        %s133 = scalar_select %p132, %s131, 63
        %s134 = smul.addr %s133, 8
        %s135 = scalar_lea.vmem %s0, %s134
        %s136 = smul.u32 32, %s9
      $region28: #{tpu_custom_call.1} parent=23 // pred_fallthru
        _
    $region24: #{tpu_custom_call.1} parent=5 // pred_fallthru
      _
    %p137 = scmp.le.s32.totalorder 1, %s9
    %p138 = scmp.lt.s32.totalorder %s9, 3
    %p139 = pnand %p137, %p138
    %p140 = pneg %p139
    // Predicated region
    $region29: #{tpu_custom_call.1} parent=5 // pred_check
      _
    $region30: #{tpu_custom_call.1} parent=5 // pred_check_branch
      %142 = sbr.rel (%p139) target = $region32
    $region31: #{tpu_custom_call.1} parent=5 // pred_region
      %s143 = ssub.s32 %s9, 1
      %s144 = smul.u32 32, %s14
      %p145 = scmp.lt.s32.totalorder %s144, 63
      %s146 = scalar_select %p145, %s144, 63
      %s147 = smul.addr %s146, 8
      %s148 = scalar_lea.vmem %s0, %s147
      %p149 = pneg %p35
      %p150 = pneg %p32
      %p151 = pneg %p56
      %p152 = pneg %p53
      %p153 = pneg %p77
      %p154 = pneg %p74
      %p155 = pneg %p103
      %p156 = pneg %p100
      %s157 = smul.u32 32, %s14
      %p158 = scmp.lt.s32.totalorder %s157, 63
      %s159 = scalar_select %p158, %s157, 63
      %s160 = smul.addr %s159, 8
      %s161 = scalar_lea.vmem %s3, %s160
      %s162 = smul.u32 32, %s14
      %p163 = scmp.lt.s32.totalorder %s162, 63
      %s164 = scalar_select %p163, %s162, 63
      %s165 = smul.addr %s164, 8
      %s166 = scalar_lea.vmem %s0, %s165
      %s167 = smul.u32 32, %s14
      %s168 = smul.u32 32, %s14
      %p169 = scmp.lt.s32.totalorder %s168, 63
      %s170 = scalar_select %p169, %s168, 63
      %s171 = smul.addr %s170, 8
      %s172 = scalar_lea.vmem %s3, %s171
      %s173 = smul.u32 32, %s14
      %v174 = vld [vmem:[%s166] sm:$0xff]
      %v175 = vld [vmem:[%s166 + $0x8] sm:$0xff]
      %v176 = vld [vmem:[%s166 + $0x10] sm:$0xff]
      %v177 = vld [vmem:[%s166 + $0x18] sm:$0xff]
      %v178 = vld [vmem:[%s166 + $0x20] sm:$0xff]
      %v179 = vld [vmem:[%s166 + $0x28] sm:$0xff]
      %v180 = vld [vmem:[%s166 + $0x30] sm:$0xff]
      %v181 = vld [vmem:[%s166 + $0x38] sm:$0xff]
      %v182 = vld [vmem:[%s166 + $0x40] sm:$0xff]
      %v183 = vld [vmem:[%s166 + $0x48] sm:$0xff]
      %v184 = vld [vmem:[%s166 + $0x50] sm:$0xff]
      %v185 = vld [vmem:[%s166 + $0x58] sm:$0xff]
      %v186 = vld [vmem:[%s166 + $0x60] sm:$0xff]
      %v187 = vld [vmem:[%s166 + $0x68] sm:$0xff]
      %v188 = vld [vmem:[%s166 + $0x70] sm:$0xff]
      %v189 = vld [vmem:[%s166 + $0x78] sm:$0xff]
      %v190 = vld [vmem:[%s166 + $0x80] sm:$0xff]
      %v191 = vld [vmem:[%s166 + $0x88] sm:$0xff]
      %v192 = vld [vmem:[%s166 + $0x90] sm:$0xff]
      %v193 = vld [vmem:[%s166 + $0x98] sm:$0xff]
      %v194 = vld [vmem:[%s166 + $0xa0] sm:$0xff]
      %v195 = vld [vmem:[%s166 + $0xa8] sm:$0xff]
      %v196 = vld [vmem:[%s166 + $0xb0] sm:$0xff]
      %v197 = vld [vmem:[%s166 + $0xb8] sm:$0xff]
      %v198 = vld [vmem:[%s166 + $0xc0] sm:$0xff]
      %v199 = vld [vmem:[%s166 + $0xc8] sm:$0xff]
      %v200 = vld [vmem:[%s166 + $0xd0] sm:$0xff]
      %v201 = vld [vmem:[%s166 + $0xd8] sm:$0xff]
      %v202 = vld [vmem:[%s166 + $0xe0] sm:$0xff]
      %v203 = vld [vmem:[%s166 + $0xe8] sm:$0xff]
      %v204 = vld [vmem:[%s166 + $0xf0] sm:$0xff]
      %v205 = vld [vmem:[%s166 + $0xf8] sm:$0xff]
      %vm206 = vcmask 261120
      %v207 = vsel %vm206, %v174, 0.0
      %208 = vadd.xlane.f32.xlu0 %v207
      %v209 = vpop.xlane.xlu0 %208
      %v210 = vsel %vm206, %v175, 0.0
      %211 = vadd.xlane.f32.xlu0 %v210
      %v212 = vpop.xlane.xlu0 %211
      %v213 = vsel %vm206, %v176, 0.0
      %214 = vadd.xlane.f32.xlu0 %v213
      %v215 = vpop.xlane.xlu0 %214
      %v216 = vsel %vm206, %v177, 0.0
      %217 = vadd.xlane.f32.xlu0 %v216
      %v218 = vpop.xlane.xlu0 %217
      %v219 = vsel %vm206, %v178, 0.0
      %220 = vadd.xlane.f32.xlu0 %v219
      %v221 = vpop.xlane.xlu0 %220
      %v222 = vsel %vm206, %v179, 0.0
      %223 = vadd.xlane.f32.xlu0 %v222
      %v224 = vpop.xlane.xlu0 %223
      %v225 = vsel %vm206, %v180, 0.0
      %226 = vadd.xlane.f32.xlu0 %v225
      %v227 = vpop.xlane.xlu0 %226
      %v228 = vsel %vm206, %v181, 0.0
      %229 = vadd.xlane.f32.xlu0 %v228
      %v230 = vpop.xlane.xlu0 %229
      %v231 = vsel %vm206, %v182, 0.0
      %232 = vadd.xlane.f32.xlu0 %v231
      %v233 = vpop.xlane.xlu0 %232
      %v234 = vsel %vm206, %v183, 0.0
      %235 = vadd.xlane.f32.xlu0 %v234
      %v236 = vpop.xlane.xlu0 %235
      %v237 = vsel %vm206, %v184, 0.0
      %238 = vadd.xlane.f32.xlu0 %v237
      %v239 = vpop.xlane.xlu0 %238
      %v240 = vsel %vm206, %v185, 0.0
      %241 = vadd.xlane.f32.xlu0 %v240
      %v242 = vpop.xlane.xlu0 %241
      %v243 = vsel %vm206, %v186, 0.0
      %244 = vadd.xlane.f32.xlu0 %v243
      %v245 = vpop.xlane.xlu0 %244
      %v246 = vsel %vm206, %v187, 0.0
      %247 = vadd.xlane.f32.xlu0 %v246
      %v248 = vpop.xlane.xlu0 %247
      %v249 = vsel %vm206, %v188, 0.0
      %250 = vadd.xlane.f32.xlu0 %v249
      %v251 = vpop.xlane.xlu0 %250
      %v252 = vsel %vm206, %v189, 0.0
      %253 = vadd.xlane.f32.xlu0 %v252
      %v254 = vpop.xlane.xlu0 %253
      %v255 = vsel %vm206, %v190, 0.0
      %256 = vadd.xlane.f32.xlu0 %v255
      %v257 = vpop.xlane.xlu0 %256
      %v258 = vsel %vm206, %v191, 0.0
      %259 = vadd.xlane.f32.xlu0 %v258
      %v260 = vpop.xlane.xlu0 %259
      %v261 = vsel %vm206, %v192, 0.0
      %262 = vadd.xlane.f32.xlu0 %v261
      %v263 = vpop.xlane.xlu0 %262
      %v264 = vsel %vm206, %v193, 0.0
      %265 = vadd.xlane.f32.xlu0 %v264
      %v266 = vpop.xlane.xlu0 %265
      %v267 = vsel %vm206, %v194, 0.0
      %268 = vadd.xlane.f32.xlu0 %v267
      %v269 = vpop.xlane.xlu0 %268
      %v270 = vsel %vm206, %v195, 0.0
      %271 = vadd.xlane.f32.xlu0 %v270
      %v272 = vpop.xlane.xlu0 %271
      %v273 = vsel %vm206, %v196, 0.0
      %274 = vadd.xlane.f32.xlu0 %v273
      %v275 = vpop.xlane.xlu0 %274
      %v276 = vsel %vm206, %v197, 0.0
      %277 = vadd.xlane.f32.xlu0 %v276
      %v278 = vpop.xlane.xlu0 %277
      %v279 = vsel %vm206, %v198, 0.0
      %280 = vadd.xlane.f32.xlu0 %v279
      %v281 = vpop.xlane.xlu0 %280
      %v282 = vsel %vm206, %v199, 0.0
      %283 = vadd.xlane.f32.xlu0 %v282
      %v284 = vpop.xlane.xlu0 %283
      %v285 = vsel %vm206, %v200, 0.0
      %286 = vadd.xlane.f32.xlu0 %v285
      %v287 = vpop.xlane.xlu0 %286
      %v288 = vsel %vm206, %v201, 0.0
      %289 = vadd.xlane.f32.xlu0 %v288
      %v290 = vpop.xlane.xlu0 %289
      %v291 = vsel %vm206, %v202, 0.0
      %292 = vadd.xlane.f32.xlu0 %v291
      %v293 = vpop.xlane.xlu0 %292
      %v294 = vsel %vm206, %v203, 0.0
      %295 = vadd.xlane.f32.xlu0 %v294
      %v296 = vpop.xlane.xlu0 %295
      %v297 = vsel %vm206, %v204, 0.0
      %298 = vadd.xlane.f32.xlu0 %v297
      %v299 = vpop.xlane.xlu0 %298
      %v300 = vsel %vm206, %v205, 0.0
      %301 = vadd.xlane.f32.xlu0 %v300
      %v302 = vpop.xlane.xlu0 %301
      %v303 = vrcp.pop 32.0
      %v304 = vmul.f32 %v209, %v303
      %v305 = vmul.f32 %v212, %v303
      %v306 = vmul.f32 %v215, %v303
      %v307 = vmul.f32 %v218, %v303
      %v308 = vmul.f32 %v221, %v303
      %v309 = vmul.f32 %v224, %v303
      %v310 = vmul.f32 %v227, %v303
      %v311 = vmul.f32 %v230, %v303
      %v312 = vmul.f32 %v233, %v303
      %v313 = vmul.f32 %v236, %v303
      %v314 = vmul.f32 %v239, %v303
      %v315 = vmul.f32 %v242, %v303
      %v316 = vmul.f32 %v245, %v303
      %v317 = vmul.f32 %v248, %v303
      %v318 = vmul.f32 %v251, %v303
      %v319 = vmul.f32 %v254, %v303
      %v320 = vmul.f32 %v257, %v303
      %v321 = vmul.f32 %v260, %v303
      %v322 = vmul.f32 %v263, %v303
      %v323 = vmul.f32 %v266, %v303
      %v324 = vmul.f32 %v269, %v303
      %v325 = vmul.f32 %v272, %v303
      %v326 = vmul.f32 %v275, %v303
      %v327 = vmul.f32 %v278, %v303
      %v328 = vmul.f32 %v281, %v303
      %v329 = vmul.f32 %v284, %v303
      %v330 = vmul.f32 %v287, %v303
      %v331 = vmul.f32 %v290, %v303
      %v332 = vmul.f32 %v293, %v303
      %v333 = vmul.f32 %v296, %v303
      %v334 = vmul.f32 %v299, %v303
      %v335 = vmul.f32 %v302, %v303
      %v336 = vmul.f32 %v174, %v174
      %v337 = vmul.f32 %v175, %v175
      %v338 = vmul.f32 %v176, %v176
      %v339 = vmul.f32 %v177, %v177
      %v340 = vmul.f32 %v178, %v178
      %v341 = vmul.f32 %v179, %v179
      %v342 = vmul.f32 %v180, %v180
      %v343 = vmul.f32 %v181, %v181
      %v344 = vmul.f32 %v182, %v182
      %v345 = vmul.f32 %v183, %v183
      %v346 = vmul.f32 %v184, %v184
      %v347 = vmul.f32 %v185, %v185
      %v348 = vmul.f32 %v186, %v186
      %v349 = vmul.f32 %v187, %v187
      %v350 = vmul.f32 %v188, %v188
      %v351 = vmul.f32 %v189, %v189
      %v352 = vmul.f32 %v190, %v190
      %v353 = vmul.f32 %v191, %v191
      %v354 = vmul.f32 %v192, %v192
      %v355 = vmul.f32 %v193, %v193
      %v356 = vmul.f32 %v194, %v194
      %v357 = vmul.f32 %v195, %v195
      %v358 = vmul.f32 %v196, %v196
      %v359 = vmul.f32 %v197, %v197
      %v360 = vmul.f32 %v198, %v198
      %v361 = vmul.f32 %v199, %v199
      %v362 = vmul.f32 %v200, %v200
      %v363 = vmul.f32 %v201, %v201
      %v364 = vmul.f32 %v202, %v202
      %v365 = vmul.f32 %v203, %v203
      %v366 = vmul.f32 %v204, %v204
      %v367 = vmul.f32 %v205, %v205
      %v368 = vsel %vm206, %v336, 0.0
      %369 = vadd.xlane.f32.xlu0 %v368
      %v370 = vpop.xlane.xlu0 %369
      %v371 = vsel %vm206, %v337, 0.0
      %372 = vadd.xlane.f32.xlu0 %v371
      %v373 = vpop.xlane.xlu0 %372
      %v374 = vsel %vm206, %v338, 0.0
      %375 = vadd.xlane.f32.xlu0 %v374
      %v376 = vpop.xlane.xlu0 %375
      %v377 = vsel %vm206, %v339, 0.0
      %378 = vadd.xlane.f32.xlu0 %v377
      %v379 = vpop.xlane.xlu0 %378
      %v380 = vsel %vm206, %v340, 0.0
      %381 = vadd.xlane.f32.xlu0 %v380
      %v382 = vpop.xlane.xlu0 %381
      %v383 = vsel %vm206, %v341, 0.0
      %384 = vadd.xlane.f32.xlu0 %v383
      %v385 = vpop.xlane.xlu0 %384
      %v386 = vsel %vm206, %v342, 0.0
      %387 = vadd.xlane.f32.xlu0 %v386
      %v388 = vpop.xlane.xlu0 %387
      %v389 = vsel %vm206, %v343, 0.0
      %390 = vadd.xlane.f32.xlu0 %v389
      %v391 = vpop.xlane.xlu0 %390
      %v392 = vsel %vm206, %v344, 0.0
      %393 = vadd.xlane.f32.xlu0 %v392
      %v394 = vpop.xlane.xlu0 %393
      %v395 = vsel %vm206, %v345, 0.0
      %396 = vadd.xlane.f32.xlu0 %v395
      %v397 = vpop.xlane.xlu0 %396
      %v398 = vsel %vm206, %v346, 0.0
      %399 = vadd.xlane.f32.xlu0 %v398
      %v400 = vpop.xlane.xlu0 %399
      %v401 = vsel %vm206, %v347, 0.0
      %402 = vadd.xlane.f32.xlu0 %v401
      %v403 = vpop.xlane.xlu0 %402
      %v404 = vsel %vm206, %v348, 0.0
      %405 = vadd.xlane.f32.xlu0 %v404
      %v406 = vpop.xlane.xlu0 %405
      %v407 = vsel %vm206, %v349, 0.0
      %408 = vadd.xlane.f32.xlu0 %v407
      %v409 = vpop.xlane.xlu0 %408
      %v410 = vsel %vm206, %v350, 0.0
      %411 = vadd.xlane.f32.xlu0 %v410
      %v412 = vpop.xlane.xlu0 %411
      %v413 = vsel %vm206, %v351, 0.0
      %414 = vadd.xlane.f32.xlu0 %v413
      %v415 = vpop.xlane.xlu0 %414
      %v416 = vsel %vm206, %v352, 0.0
      %417 = vadd.xlane.f32.xlu0 %v416
      %v418 = vpop.xlane.xlu0 %417
      %v419 = vsel %vm206, %v353, 0.0
      %420 = vadd.xlane.f32.xlu0 %v419
      %v421 = vpop.xlane.xlu0 %420
      %v422 = vsel %vm206, %v354, 0.0
      %423 = vadd.xlane.f32.xlu0 %v422
      %v424 = vpop.xlane.xlu0 %423
      %v425 = vsel %vm206, %v355, 0.0
      %426 = vadd.xlane.f32.xlu0 %v425
      %v427 = vpop.xlane.xlu0 %426
      %v428 = vsel %vm206, %v356, 0.0
      %429 = vadd.xlane.f32.xlu0 %v428
      %v430 = vpop.xlane.xlu0 %429
      %v431 = vsel %vm206, %v357, 0.0
      %432 = vadd.xlane.f32.xlu0 %v431
      %v433 = vpop.xlane.xlu0 %432
      %v434 = vsel %vm206, %v358, 0.0
      %435 = vadd.xlane.f32.xlu0 %v434
      %v436 = vpop.xlane.xlu0 %435
      %v437 = vsel %vm206, %v359, 0.0
      %438 = vadd.xlane.f32.xlu0 %v437
      %v439 = vpop.xlane.xlu0 %438
      %v440 = vsel %vm206, %v360, 0.0
      %441 = vadd.xlane.f32.xlu0 %v440
      %v442 = vpop.xlane.xlu0 %441
      %v443 = vsel %vm206, %v361, 0.0
      %444 = vadd.xlane.f32.xlu0 %v443
      %v445 = vpop.xlane.xlu0 %444
      %v446 = vsel %vm206, %v362, 0.0
      %447 = vadd.xlane.f32.xlu0 %v446
      %v448 = vpop.xlane.xlu0 %447
      %v449 = vsel %vm206, %v363, 0.0
      %450 = vadd.xlane.f32.xlu0 %v449
      %v451 = vpop.xlane.xlu0 %450
      %v452 = vsel %vm206, %v364, 0.0
      %453 = vadd.xlane.f32.xlu0 %v452
      %v454 = vpop.xlane.xlu0 %453
      %v455 = vsel %vm206, %v365, 0.0
      %456 = vadd.xlane.f32.xlu0 %v455
      %v457 = vpop.xlane.xlu0 %456
      %v458 = vsel %vm206, %v366, 0.0
      %459 = vadd.xlane.f32.xlu0 %v458
      %v460 = vpop.xlane.xlu0 %459
      %v461 = vsel %vm206, %v367, 0.0
      %462 = vadd.xlane.f32.xlu0 %v461
      %v463 = vpop.xlane.xlu0 %462
      %v464 = vmul.f32 %v370, %v303
      %v465 = vmul.f32 %v373, %v303
      %v466 = vmul.f32 %v376, %v303
      %v467 = vmul.f32 %v379, %v303
      %v468 = vmul.f32 %v382, %v303
      %v469 = vmul.f32 %v385, %v303
      %v470 = vmul.f32 %v388, %v303
      %v471 = vmul.f32 %v391, %v303
      %v472 = vmul.f32 %v394, %v303
      %v473 = vmul.f32 %v397, %v303
      %v474 = vmul.f32 %v400, %v303
      %v475 = vmul.f32 %v403, %v303
      %v476 = vmul.f32 %v406, %v303
      %v477 = vmul.f32 %v409, %v303
      %v478 = vmul.f32 %v412, %v303
      %v479 = vmul.f32 %v415, %v303
      %v480 = vmul.f32 %v418, %v303
      %v481 = vmul.f32 %v421, %v303
      %v482 = vmul.f32 %v424, %v303
      %v483 = vmul.f32 %v427, %v303
      %v484 = vmul.f32 %v430, %v303
      %v485 = vmul.f32 %v433, %v303
      %v486 = vmul.f32 %v436, %v303
      %v487 = vmul.f32 %v439, %v303
      %v488 = vmul.f32 %v442, %v303
      %v489 = vmul.f32 %v445, %v303
      %v490 = vmul.f32 %v448, %v303
      %v491 = vmul.f32 %v451, %v303
      %v492 = vmul.f32 %v454, %v303
      %v493 = vmul.f32 %v457, %v303
      %v494 = vmul.f32 %v460, %v303
      %v495 = vmul.f32 %v463, %v303
      %v496 = vmul.f32 %v304, %v304
      %v497 = vmul.f32 %v305, %v305
      %v498 = vmul.f32 %v306, %v306
      %v499 = vmul.f32 %v307, %v307
      %v500 = vmul.f32 %v308, %v308
      %v501 = vmul.f32 %v309, %v309
      %v502 = vmul.f32 %v310, %v310
      %v503 = vmul.f32 %v311, %v311
      %v504 = vmul.f32 %v312, %v312
      %v505 = vmul.f32 %v313, %v313
      %v506 = vmul.f32 %v314, %v314
      %v507 = vmul.f32 %v315, %v315
      %v508 = vmul.f32 %v316, %v316
      %v509 = vmul.f32 %v317, %v317
      %v510 = vmul.f32 %v318, %v318
      %v511 = vmul.f32 %v319, %v319
      %v512 = vmul.f32 %v320, %v320
      %v513 = vmul.f32 %v321, %v321
      %v514 = vmul.f32 %v322, %v322
      %v515 = vmul.f32 %v323, %v323
      %v516 = vmul.f32 %v324, %v324
      %v517 = vmul.f32 %v325, %v325
      %v518 = vmul.f32 %v326, %v326
      %v519 = vmul.f32 %v327, %v327
      %v520 = vmul.f32 %v328, %v328
      %v521 = vmul.f32 %v329, %v329
      %v522 = vmul.f32 %v330, %v330
      %v523 = vmul.f32 %v331, %v331
      %v524 = vmul.f32 %v332, %v332
      %v525 = vmul.f32 %v333, %v333
      %v526 = vmul.f32 %v334, %v334
      %v527 = vmul.f32 %v335, %v335
      %v528 = vsub.f32 %v464, %v496
      %v529 = vsub.f32 %v465, %v497
      %v530 = vsub.f32 %v466, %v498
      %v531 = vsub.f32 %v467, %v499
      %v532 = vsub.f32 %v468, %v500
      %v533 = vsub.f32 %v469, %v501
      %v534 = vsub.f32 %v470, %v502
      %v535 = vsub.f32 %v471, %v503
      %v536 = vsub.f32 %v472, %v504
      %v537 = vsub.f32 %v473, %v505
      %v538 = vsub.f32 %v474, %v506
      %v539 = vsub.f32 %v475, %v507
      %v540 = vsub.f32 %v476, %v508
      %v541 = vsub.f32 %v477, %v509
      %v542 = vsub.f32 %v478, %v510
      %v543 = vsub.f32 %v479, %v511
      %v544 = vsub.f32 %v480, %v512
      %v545 = vsub.f32 %v481, %v513
      %v546 = vsub.f32 %v482, %v514
      %v547 = vsub.f32 %v483, %v515
      %v548 = vsub.f32 %v484, %v516
      %v549 = vsub.f32 %v485, %v517
      %v550 = vsub.f32 %v486, %v518
      %v551 = vsub.f32 %v487, %v519
      %v552 = vsub.f32 %v488, %v520
      %v553 = vsub.f32 %v489, %v521
      %v554 = vsub.f32 %v490, %v522
      %v555 = vsub.f32 %v491, %v523
      %v556 = vsub.f32 %v492, %v524
      %v557 = vsub.f32 %v493, %v525
      %v558 = vsub.f32 %v494, %v526
      %v559 = vsub.f32 %v495, %v527
      %v560 = vadd.f32 %v528, 1e-05
      %v561 = vadd.f32 %v529, 1e-05
      %v562 = vadd.f32 %v530, 1e-05
      %v563 = vadd.f32 %v531, 1e-05
      %v564 = vadd.f32 %v532, 1e-05
      %v565 = vadd.f32 %v533, 1e-05
      %v566 = vadd.f32 %v534, 1e-05
      %v567 = vadd.f32 %v535, 1e-05
      %v568 = vadd.f32 %v536, 1e-05
      %v569 = vadd.f32 %v537, 1e-05
      %v570 = vadd.f32 %v538, 1e-05
      %v571 = vadd.f32 %v539, 1e-05
      %v572 = vadd.f32 %v540, 1e-05
      %v573 = vadd.f32 %v541, 1e-05
      %v574 = vadd.f32 %v542, 1e-05
      %v575 = vadd.f32 %v543, 1e-05
      %v576 = vadd.f32 %v544, 1e-05
      %v577 = vadd.f32 %v545, 1e-05
      %v578 = vadd.f32 %v546, 1e-05
      %v579 = vadd.f32 %v547, 1e-05
      %v580 = vadd.f32 %v548, 1e-05
      %v581 = vadd.f32 %v549, 1e-05
      %v582 = vadd.f32 %v550, 1e-05
      %v583 = vadd.f32 %v551, 1e-05
      %v584 = vadd.f32 %v552, 1e-05
      %v585 = vadd.f32 %v553, 1e-05
      %v586 = vadd.f32 %v554, 1e-05
      %v587 = vadd.f32 %v555, 1e-05
      %v588 = vadd.f32 %v556, 1e-05
      %v589 = vadd.f32 %v557, 1e-05
      %v590 = vadd.f32 %v558, 1e-05
      %v591 = vadd.f32 %v559, 1e-05
      %v592 = vrsqrt.pop %v560
      %v593 = vrsqrt.pop %v561
      %v594 = vrsqrt.pop %v562
      %v595 = vrsqrt.pop %v563
      %v596 = vrsqrt.pop %v564
      %v597 = vrsqrt.pop %v565
      %v598 = vrsqrt.pop %v566
      %v599 = vrsqrt.pop %v567
      %v600 = vrsqrt.pop %v568
      %v601 = vrsqrt.pop %v569
      %v602 = vrsqrt.pop %v570
      %v603 = vrsqrt.pop %v571
      %v604 = vrsqrt.pop %v572
      %v605 = vrsqrt.pop %v573
      %v606 = vrsqrt.pop %v574
      %v607 = vrsqrt.pop %v575
      %v608 = vrsqrt.pop %v576
      %v609 = vrsqrt.pop %v577
      %v610 = vrsqrt.pop %v578
      %v611 = vrsqrt.pop %v579
      %v612 = vrsqrt.pop %v580
      %v613 = vrsqrt.pop %v581
      %v614 = vrsqrt.pop %v582
      %v615 = vrsqrt.pop %v583
      %v616 = vrsqrt.pop %v584
      %v617 = vrsqrt.pop %v585
      %v618 = vrsqrt.pop %v586
      %v619 = vrsqrt.pop %v587
      %v620 = vrsqrt.pop %v588
      %v621 = vrsqrt.pop %v589
      %v622 = vrsqrt.pop %v590
      %v623 = vrsqrt.pop %v591
      %v624 = vsub.f32 %v174, %v304
      %v625 = vsub.f32 %v175, %v305
      %v626 = vsub.f32 %v176, %v306
      %v627 = vsub.f32 %v177, %v307
      %v628 = vsub.f32 %v178, %v308
      %v629 = vsub.f32 %v179, %v309
      %v630 = vsub.f32 %v180, %v310
      %v631 = vsub.f32 %v181, %v311
      %v632 = vsub.f32 %v182, %v312
      %v633 = vsub.f32 %v183, %v313
      %v634 = vsub.f32 %v184, %v314
      %v635 = vsub.f32 %v185, %v315
      %v636 = vsub.f32 %v186, %v316
      %v637 = vsub.f32 %v187, %v317
      %v638 = vsub.f32 %v188, %v318
      %v639 = vsub.f32 %v189, %v319
      %v640 = vsub.f32 %v190, %v320
      %v641 = vsub.f32 %v191, %v321
      %v642 = vsub.f32 %v192, %v322
      %v643 = vsub.f32 %v193, %v323
      %v644 = vsub.f32 %v194, %v324
      %v645 = vsub.f32 %v195, %v325
      %v646 = vsub.f32 %v196, %v326
      %v647 = vsub.f32 %v197, %v327
      %v648 = vsub.f32 %v198, %v328
      %v649 = vsub.f32 %v199, %v329
      %v650 = vsub.f32 %v200, %v330
      %v651 = vsub.f32 %v201, %v331
      %v652 = vsub.f32 %v202, %v332
      %v653 = vsub.f32 %v203, %v333
      %v654 = vsub.f32 %v204, %v334
      %v655 = vsub.f32 %v205, %v335
      %v656 = vmul.f32 %v624, %v592
      %v657 = vmul.f32 %v625, %v593
      %v658 = vmul.f32 %v626, %v594
      %v659 = vmul.f32 %v627, %v595
      %v660 = vmul.f32 %v628, %v596
      %v661 = vmul.f32 %v629, %v597
      %v662 = vmul.f32 %v630, %v598
      %v663 = vmul.f32 %v631, %v599
      %v664 = vmul.f32 %v632, %v600
      %v665 = vmul.f32 %v633, %v601
      %v666 = vmul.f32 %v634, %v602
      %v667 = vmul.f32 %v635, %v603
      %v668 = vmul.f32 %v636, %v604
      %v669 = vmul.f32 %v637, %v605
      %v670 = vmul.f32 %v638, %v606
      %v671 = vmul.f32 %v639, %v607
      %v672 = vmul.f32 %v640, %v608
      %v673 = vmul.f32 %v641, %v609
      %v674 = vmul.f32 %v642, %v610
      %v675 = vmul.f32 %v643, %v611
      %v676 = vmul.f32 %v644, %v612
      %v677 = vmul.f32 %v645, %v613
      %v678 = vmul.f32 %v646, %v614
      %v679 = vmul.f32 %v647, %v615
      %v680 = vmul.f32 %v648, %v616
      %v681 = vmul.f32 %v649, %v617
      %v682 = vmul.f32 %v650, %v618
      %v683 = vmul.f32 %v651, %v619
      %v684 = vmul.f32 %v652, %v620
      %v685 = vmul.f32 %v653, %v621
      %v686 = vmul.f32 %v654, %v622
      %v687 = vmul.f32 %v655, %v623
      %v688 = vld [vmem:[%s1] sm:$0x1]
      %v690 = vlaneseq
      %v691 = vshrl.u32 %v690, 7
      %v692 = vsub.s32 0, %v691
      %v693 = vrot.slane %v688, %v692
      %v695 = vmul.f32 %v656, %v693
      %v696 = vmul.f32 %v657, %v693
      %v697 = vmul.f32 %v658, %v693
      %v698 = vmul.f32 %v659, %v693
      %v699 = vmul.f32 %v660, %v693
      %v700 = vmul.f32 %v661, %v693
      %v701 = vmul.f32 %v662, %v693
      %v702 = vmul.f32 %v663, %v693
      %v703 = vmul.f32 %v664, %v693
      %v704 = vmul.f32 %v665, %v693
      %v705 = vmul.f32 %v666, %v693
      %v706 = vmul.f32 %v667, %v693
      %v707 = vmul.f32 %v668, %v693
      %v708 = vmul.f32 %v669, %v693
      %v709 = vmul.f32 %v670, %v693
      %v710 = vmul.f32 %v671, %v693
      %v711 = vmul.f32 %v672, %v693
      %v712 = vmul.f32 %v673, %v693
      %v713 = vmul.f32 %v674, %v693
      %v714 = vmul.f32 %v675, %v693
      %v715 = vmul.f32 %v676, %v693
      %v716 = vmul.f32 %v677, %v693
      %v717 = vmul.f32 %v678, %v693
      %v718 = vmul.f32 %v679, %v693
      %v719 = vmul.f32 %v680, %v693
      %v720 = vmul.f32 %v681, %v693
      %v721 = vmul.f32 %v682, %v693
      %v722 = vmul.f32 %v683, %v693
      %v723 = vmul.f32 %v684, %v693
      %v724 = vmul.f32 %v685, %v693
      %v725 = vmul.f32 %v686, %v693
      %v726 = vmul.f32 %v687, %v693
      %v727 = vld [vmem:[%s2] sm:$0x1]
      %v729 = vlaneseq
      %v730 = vshrl.u32 %v729, 7
      %v731 = vsub.s32 0, %v730
      %v732 = vrot.slane %v727, %v731
      %v734 = vadd.f32 %v695, %v732
      %v735 = vadd.f32 %v696, %v732
      %v736 = vadd.f32 %v697, %v732
      %v737 = vadd.f32 %v698, %v732
      %v738 = vadd.f32 %v699, %v732
      %v739 = vadd.f32 %v700, %v732
      %v740 = vadd.f32 %v701, %v732
      %v741 = vadd.f32 %v702, %v732
      %v742 = vadd.f32 %v703, %v732
      %v743 = vadd.f32 %v704, %v732
      %v744 = vadd.f32 %v705, %v732
      %v745 = vadd.f32 %v706, %v732
      %v746 = vadd.f32 %v707, %v732
      %v747 = vadd.f32 %v708, %v732
      %v748 = vadd.f32 %v709, %v732
      %v749 = vadd.f32 %v710, %v732
      %v750 = vadd.f32 %v711, %v732
      %v751 = vadd.f32 %v712, %v732
      %v752 = vadd.f32 %v713, %v732
      %v753 = vadd.f32 %v714, %v732
      %v754 = vadd.f32 %v715, %v732
      %v755 = vadd.f32 %v716, %v732
      %v756 = vadd.f32 %v717, %v732
      %v757 = vadd.f32 %v718, %v732
      %v758 = vadd.f32 %v719, %v732
      %v759 = vadd.f32 %v720, %v732
      %v760 = vadd.f32 %v721, %v732
      %v761 = vadd.f32 %v722, %v732
      %v762 = vadd.f32 %v723, %v732
      %v763 = vadd.f32 %v724, %v732
      %v764 = vadd.f32 %v725, %v732
      %v765 = vadd.f32 %v726, %v732
      %766 = vst.msk [vmem:[%s172] sm:$0xff] %vm206, %v734
      %767 = vst.msk [vmem:[%s172 + $0x8] sm:$0xff] %vm206, %v735
      %768 = vst.msk [vmem:[%s172 + $0x10] sm:$0xff] %vm206, %v736
      %769 = vst.msk [vmem:[%s172 + $0x18] sm:$0xff] %vm206, %v737
      %770 = vst.msk [vmem:[%s172 + $0x20] sm:$0xff] %vm206, %v738
      %771 = vst.msk [vmem:[%s172 + $0x28] sm:$0xff] %vm206, %v739
      %772 = vst.msk [vmem:[%s172 + $0x30] sm:$0xff] %vm206, %v740
      %773 = vst.msk [vmem:[%s172 + $0x38] sm:$0xff] %vm206, %v741
      %774 = vst.msk [vmem:[%s172 + $0x40] sm:$0xff] %vm206, %v742
      %775 = vst.msk [vmem:[%s172 + $0x48] sm:$0xff] %vm206, %v743
      %776 = vst.msk [vmem:[%s172 + $0x50] sm:$0xff] %vm206, %v744
      %777 = vst.msk [vmem:[%s172 + $0x58] sm:$0xff] %vm206, %v745
      %778 = vst.msk [vmem:[%s172 + $0x60] sm:$0xff] %vm206, %v746
      %779 = vst.msk [vmem:[%s172 + $0x68] sm:$0xff] %vm206, %v747
      %780 = vst.msk [vmem:[%s172 + $0x70] sm:$0xff] %vm206, %v748
      %781 = vst.msk [vmem:[%s172 + $0x78] sm:$0xff] %vm206, %v749
      %782 = vst.msk [vmem:[%s172 + $0x80] sm:$0xff] %vm206, %v750
      %783 = vst.msk [vmem:[%s172 + $0x88] sm:$0xff] %vm206, %v751
      %784 = vst.msk [vmem:[%s172 + $0x90] sm:$0xff] %vm206, %v752
      %785 = vst.msk [vmem:[%s172 + $0x98] sm:$0xff] %vm206, %v753
      %786 = vst.msk [vmem:[%s172 + $0xa0] sm:$0xff] %vm206, %v754
      %787 = vst.msk [vmem:[%s172 + $0xa8] sm:$0xff] %vm206, %v755
      %788 = vst.msk [vmem:[%s172 + $0xb0] sm:$0xff] %vm206, %v756
      %789 = vst.msk [vmem:[%s172 + $0xb8] sm:$0xff] %vm206, %v757
      %790 = vst.msk [vmem:[%s172 + $0xc0] sm:$0xff] %vm206, %v758
      %791 = vst.msk [vmem:[%s172 + $0xc8] sm:$0xff] %vm206, %v759
      %792 = vst.msk [vmem:[%s172 + $0xd0] sm:$0xff] %vm206, %v760
      %793 = vst.msk [vmem:[%s172 + $0xd8] sm:$0xff] %vm206, %v761
      %794 = vst.msk [vmem:[%s172 + $0xe0] sm:$0xff] %vm206, %v762
      %795 = vst.msk [vmem:[%s172 + $0xe8] sm:$0xff] %vm206, %v763
      %796 = vst.msk [vmem:[%s172 + $0xf0] sm:$0xff] %vm206, %v764
      %797 = vst.msk [vmem:[%s172 + $0xf8] sm:$0xff] %vm206, %v765
      %s798 = smul.u32 32, %s14
      %p799 = scmp.lt.s32.totalorder %s798, 63
      %s800 = scalar_select %p799, %s798, 63
      %s801 = smul.addr %s800, 8
      %s802 = scalar_lea.vmem %s3, %s801
      // Predicated region
      $region33: #{tpu_custom_call.1} parent=31 // pred_check
        %p803 = pneg %p100
      $region34: #{tpu_custom_call.1} parent=31 // pred_check_branch
        %805 = sbr.rel (%p803) target = $region36
      $region35: #{tpu_custom_call.1} parent=31 // pred_region
        %s806 = smul.u32 32, %s14
      $region36: #{tpu_custom_call.1} parent=31 // pred_fallthru
        _
    $region32: #{tpu_custom_call.1} parent=5 // pred_fallthru
      _
    %p807 = scmp.le.s32.totalorder 2, %s9
    // Predicated region
    $region37: #{tpu_custom_call.1} parent=5 // pred_check
      %p808 = pneg %p807
    $region38: #{tpu_custom_call.1} parent=5 // pred_check_branch
      %810 = sbr.rel (%p808) target = $region40
    $region39: #{tpu_custom_call.1} parent=5 // pred_region
      %s811 = ssub.s32 %s9, 2
      // Predicated region
      $region41: #{tpu_custom_call.1} parent=39 // pred_check
        %p812 = pneg %p106
      $region42: #{tpu_custom_call.1} parent=39 // pred_check_branch
        %814 = sbr.rel (%p812) target = $region44
      $region43: #{tpu_custom_call.1} parent=39 // pred_region
        %s815 = smul.u32 32, %s15
        %p816 = scmp.lt.s32.totalorder %s815, 63
        %s817 = scalar_select %p816, %s815, 63
        %s818 = smul.addr %s817, 8
        %s819 = scalar_lea.vmem %s3, %s818
      $region44: #{tpu_custom_call.1} parent=39 // pred_fallthru
        _
    $region40: #{tpu_custom_call.1} parent=5 // pred_fallthru
      _
  $region6: #{tpu_custom_call.1} parent=0 // loop_footer
    %s13 = sadd.s32 1, %s9
  $region7: #{tpu_custom_call.1} parent=0 // loop_footer_branch
    %8 = sbr.rel target = $region3
  $region8: #{tpu_custom_call.1} parent=0 // loop_exit
    _

</llo_original>
